<compile_context>
chip_gen: v7x
topology: tpu7x:2x2x1
jax: 0.10.0
libtpu: 0.0.40
codegen_flags: <defaults>
</compile_context>

<pallas_src>
import math
from functools import partial

import jax
import jax.numpy as jnp
from jax.experimental import pallas as pl
from jax.experimental.pallas import tpu as pltpu


# --------------------------------- kernels ---------------------------------


def _matmul_bn_prelu_kernel(p_ref, w_ref, ss_ref, o_ref):
    """im2col path: one MXU matmul per (batch, output-row-tile) grid step.

    p_ref:  (1, hw, K)         bf16 im2col patches tile
    w_ref:  (K, Cout_pad)      bf16, BN scale pre-folded
    ss_ref: (2, Cout_pad)      f32: row 0 = BN shift, row 1 = PReLU alpha
    o_ref:  (1, hw, Cout_pad)
    """
    acc = jnp.dot(p_ref[0], w_ref[...], preferred_element_type=jnp.float32)
    y = acc + ss_ref[0:1, :]
    o_ref[0] = jnp.where(y >= 0.0, y, ss_ref[1:2, :] * y).astype(o_ref.dtype)


def _conv_tap_kernel(x_ref, w_ref, ss_ref, o_ref, acc_ref, *,
                     kh_kw, stride, row_tile, w_out, hpp, depthwise):
    """General path: per-tap MXU (dense) / VPU (depthwise) accumulation in VMEM.

    x_ref:   (1, P*Hpp, Wpp, Cin_blk)  phase-split padded input (bf16), whole image
    w_ref:   (KH, KW, Cin_blk, Cout_pad)  (dense)   BN scale pre-folded, bf16
             (KH, KW, 1,       Cout_pad)  (depthwise)
    ss_ref:  (2, Cout_pad)             f32: BN shift / PReLU alpha
    o_ref:   (1, hw, Cout_pad)
    acc_ref: VMEM (hw, Cout_pad) f32 scratch accumulator (P3 init/finalize pattern)
    """
    KH, KW = kh_kw
    sh, sw = stride
    th = row_tile
    hw = th * w_out

    r = pl.program_id(1)
    row_base = r * th
    if th & (th - 1) == 0:                       # divisibility hint (power-of-2 tiles)
        row_base = pl.multiple_of(row_base, th)

    acc_ref[...] = jnp.zeros_like(acc_ref)

    # Depthwise: hoist the weight load / f32 cast out of the tap loop (VALU-bound path).
    w_all = w_ref[...].astype(jnp.float32) if depthwise else None

    for kh in range(KH):
        qh, p = divmod(kh, sh)                   # phase p, in-phase row offset qh
        for kw in range(KW):
            qw, q = divmod(kw, sw)
            pidx = p * sw + q
            # Contiguous window read straight from the VMEM ref (no value slicing).
            patch = x_ref[0,
                          pl.ds(pidx * hpp + qh + row_base, th),
                          pl.ds(qw, w_out), :]
            patch = patch.reshape(hw, patch.shape[-1])
            if depthwise:
                acc_ref[...] += patch.astype(jnp.float32) * w_all[kh, kw, 0][None, :]
            else:
                acc_ref[...] += jnp.dot(patch, w_ref[kh, kw],
                                        preferred_element_type=jnp.float32)

    y = acc_ref[...] + ss_ref[0:1, :]
    o_ref[0] = jnp.where(y >= 0.0, y, ss_ref[1:2, :] * y).astype(o_ref.dtype)


# --------------------------------- helpers ---------------------------------


def _pick_row_tile(h_out, w_out, lo=256, hi=512):
    """Row tile th: (th*w_out) % 8 == 0, flattened size targeted into [lo, hi].
    Never falls back to a whole-image tile for large images; the caller pads the
    output rows to a multiple of th (garbage rows are sliced off afterwards)."""
    th0 = 8 // math.gcd(w_out, 8)                # smallest th with (th*w_out) % 8 == 0
    th = th0
    while th * w_out < lo and th < h_out:
        th += th0
    while th * w_out > hi and th > th0:
        th -= th0
    return th


def _clamp_vmem(need_bytes):
    """Clamp the requested VMEM limit to the chip's physical capacity minus headroom
    (v7x: 64 MiB per TensorCore; v5e/v6e: 128 MiB)."""
    cap = 64 << 20
    try:
        cap = int(getattr(pltpu.get_tpu_info(), "vmem_capacity_bytes", cap))
    except Exception:
        pass
    lim = max(int(need_bytes), 32 << 20)
    return int(max(min(lim, cap - (4 << 20)), 16 << 20))


# --------------------------------- wrapper ---------------------------------


def conv_block(x_nchw, w_oihw, gamma, beta, running_mean, running_var, alpha,
               *, stride=(1, 1), padding=(0, 0), groups=1, eps=1e-5, out_dtype=None):
    """Fused Conv2d(bias=False) + BatchNorm2d(eval) + PReLU. Input/Output NCHW."""
    N, Cin, H, W = x_nchw.shape
    Cout, Cin_g, KH, KW = w_oihw.shape
    assert Cin_g * groups == Cin and Cout % groups == 0
    sh, sw = stride
    pad_h, pad_w = padding
    H_pad, W_pad = H + 2 * pad_h, W + 2 * pad_w
    H_out = (H_pad - KH) // sh + 1
    W_out = (W_pad - KW) // sw + 1
    out_dtype = jnp.dtype(out_dtype) if out_dtype is not None else jnp.dtype(x_nchw.dtype)

    depthwise = groups > 1 and groups == Cin and Cout == Cin

    # ---------------- BN folding / PReLU packing (wrapper, plain JAX) ----------------
    scale = gamma.astype(jnp.float32) / jnp.sqrt(running_var.astype(jnp.float32) + eps)
    shift = beta.astype(jnp.float32) - running_mean.astype(jnp.float32) * scale
    alpha = jnp.asarray(alpha, jnp.float32).reshape(-1)
    if alpha.shape[0] == 1:                      # nn.PReLU() default: shared slope
        alpha = jnp.broadcast_to(alpha, (Cout,))

    # Grouped (non-depthwise) conv -> dense conv with a block-diagonal weight so the
    # kernel only ever issues lane-dense MXU matmuls and lane-dense stores.
    w_f32 = w_oihw.astype(jnp.float32)
    if groups > 1 and not depthwise:
        cout_g = Cout // groups
        w_bd = jnp.zeros((Cout, Cin, KH, KW), jnp.float32)
        for g in range(groups):
            w_bd = w_bd.at[g * cout_g:(g + 1) * cout_g,
                           g * Cin_g:(g + 1) * Cin_g].set(
                w_f32[g * cout_g:(g + 1) * cout_g])
        w_f32 = w_bd
        Cin_g = Cin
    dense = not depthwise

    # Lane padding: multiples of 128; when Cout exceeds one lane group, round to 256
    # so the v6e/v7x 256-wide MXU N dim is fully fed (typical channel counts unchanged).
    Cout_pad = -(-Cout // 128) * 128
    if Cout_pad > 128:
        Cout_pad = -(-Cout // 256) * 256

    # BN scale folded into the weights; HWIO; pad Cout to the lane width; bf16 for MXU.
    w_hwio = jnp.transpose(w_f32 * scale[:, None, None, None], (2, 3, 1, 0))
    w_hwio = jnp.pad(w_hwio, ((0, 0), (0, 0), (0, 0), (0, Cout_pad - Cout)))
    w_hwio = w_hwio.astype(jnp.bfloat16)         # (KH, KW, Cin_eff or 1, Cout_pad)

    # Packed per-channel epilogue params: row 0 = BN shift, row 1 = PReLU alpha.
    ss = jnp.stack([jnp.pad(shift, (0, Cout_pad - Cout)),
                    jnp.pad(alpha, (0, Cout_pad - Cout))], axis=0)       # (2, Cout_pad)

    # ------------------------- input prep (wrapper, plain JAX) -----------------------
    cpad_in = (Cout_pad - Cin) if depthwise else 0
    x = jnp.transpose(x_nchw, (0, 2, 3, 1))
    x = jnp.pad(x, ((0, 0), (pad_h, pad_h), (pad_w, pad_w), (0, cpad_in)))
    x = x.astype(jnp.bfloat16)
    Cin_blk = x.shape[-1]

    th = _pick_row_tile(H_out, W_out)
    R = -(-H_out // th)
    rows = R * th                                # padded output rows (tail sliced off)
    hw = th * W_out

    # Stride-phase split: phase (p, q) holds x_pad[:, p::sh, q::sw, :]; after this
    # every in-kernel tap is a contiguous window (no strided VMEM slices).
    Hpp = rows + (KH - 1) // sh
    Wpp = W_out + (KW - 1) // sw
    phases = []
    for p in range(sh):
        for q in range(sw):
            xp = x[:, p::sh, q::sw, :][:, :Hpp, :Wpp, :]
            xp = jnp.pad(xp, ((0, 0), (0, Hpp - xp.shape[1]),
                              (0, Wpp - xp.shape[2]), (0, 0)))
            phases.append(xp)

    use_im2col = dense and (KH * KW * Cin_blk <= 256)

    if use_im2col:
        # Stem-style conv: im2col in the wrapper, ONE matmul per tile (K = KH*KW*Cin).
        taps = []
        for kh in range(KH):
            qh, p = divmod(kh, sh)
            for kw in range(KW):
                qw, q = divmod(kw, sw)
                taps.append(phases[p * sw + q][:, qh:qh + rows, qw:qw + W_out, :])
        K = KH * KW * Cin_blk
        patches = jnp.concatenate(taps, axis=-1).reshape(N, rows * W_out, K)
        w_mat = w_hwio.reshape(K, Cout_pad)

        vmem_need = (2 * (hw * K * 2 + K * Cout_pad * 2 + 2 * Cout_pad * 4
                          + hw * Cout_pad * out_dtype.itemsize) + (2 << 20))
        out = pl.pallas_call(
            _matmul_bn_prelu_kernel,
            out_shape=jax.ShapeDtypeStruct((N, rows * W_out, Cout_pad), out_dtype),
            grid_spec=pltpu.PrefetchScalarGridSpec(
                num_scalar_prefetch=0,
                grid=(N, R),
                in_specs=[
                    pl.BlockSpec((1, hw, K), lambda n, r: (n, r, 0)),
                    pl.BlockSpec((K, Cout_pad), lambda n, r: (0, 0)),
                    pl.BlockSpec((2, Cout_pad), lambda n, r: (0, 0)),
                ],
                out_specs=pl.BlockSpec((1, hw, Cout_pad), lambda n, r: (n, r, 0)),
            ),
            compiler_params=pltpu.CompilerParams(
                dimension_semantics=("parallel", "parallel"),
                vmem_limit_bytes=_clamp_vmem(vmem_need)),
        )(patches, w_mat, ss)
    else:
        # General per-tap path (large-Cin dense / depthwise), phases stacked along H.
        x_in = jnp.concatenate(phases, axis=1)   # (N, P*Hpp, Wpp, Cin_blk)
        P = sh * sw
        kernel = partial(_conv_tap_kernel, kh_kw=(KH, KW), stride=(sh, sw),
                         row_tile=th, w_out=W_out, hpp=Hpp, depthwise=depthwise)
        vmem_need = (2 * (P * Hpp * Wpp * Cin_blk * 2
                          + KH * KW * w_hwio.shape[2] * Cout_pad * 2
                          + 2 * Cout_pad * 4
                          + hw * Cout_pad * out_dtype.itemsize)
                     + hw * Cout_pad * 4 + (2 << 20))
        out = pl.pallas_call(
            kernel,
            out_shape=jax.ShapeDtypeStruct((N, rows * W_out, Cout_pad), out_dtype),
            grid_spec=pltpu.PrefetchScalarGridSpec(
                num_scalar_prefetch=0,
                grid=(N, R),
                in_specs=[
                    pl.BlockSpec((1, P * Hpp, Wpp, Cin_blk), lambda n, r: (n, 0, 0, 0)),
                    pl.BlockSpec(w_hwio.shape, lambda n, r: (0, 0, 0, 0)),
                    pl.BlockSpec((2, Cout_pad), lambda n, r: (0, 0)),
                ],
                out_specs=pl.BlockSpec((1, hw, Cout_pad), lambda n, r: (n, r, 0)),
                scratch_shapes=[pltpu.VMEM((hw, Cout_pad), jnp.float32)],
            ),
            compiler_params=pltpu.CompilerParams(
                dimension_semantics=("parallel", "parallel"),
                vmem_limit_bytes=_clamp_vmem(vmem_need)),
        )(x_in, w_hwio, ss)

    out = out[:, :H_out * W_out, :Cout].reshape(N, H_out, W_out, Cout)
    return jnp.transpose(out, (0, 3, 1, 2))      # back to NCHW


# ----------------------------- references (plain JAX) -----------------------------


def _prelu(y, alpha):
    a = jnp.asarray(alpha).reshape(-1)
    if a.shape[0] == 1:
        a = jnp.broadcast_to(a, (y.shape[1],))
    a = a.reshape(1, -1, 1, 1)
    return jnp.where(y >= 0, y, a * y)


def _reference_f32(x, w, gamma, beta, mean, var, alpha, *, stride, padding, groups, eps=1e-5):
    y = jax.lax.conv_general_dilated(
        x, w, window_strides=stride,
        padding=[(padding[0], padding[0]), (padding[1], padding[1])],
        dimension_numbers=("NCHW", "OIHW", "NCHW"),
        feature_group_count=groups)
    scale = gamma / jnp.sqrt(var + eps)
    y = y * scale.reshape(1, -1, 1, 1) + (beta - mean * scale).reshape(1, -1, 1, 1)
    return _prelu(y, alpha)


def _reference_bf16(x, w, gamma, beta, mean, var, alpha, *, stride, padding, groups, eps=1e-5):
    # Mirrors the kernel's numerics: BN scale folded into weights, bf16-rounded
    # inputs/weights, f32 accumulation, f32 epilogue.
    scale = gamma / jnp.sqrt(var + eps)
    shift = beta - mean * scale
    wq = (w * scale.reshape(-1, 1, 1, 1)).astype(jnp.bfloat16).astype(jnp.float32)
    xq = x.astype(jnp.bfloat16).astype(jnp.float32)
    y = jax.lax.conv_general_dilated(
        xq, wq, window_strides=stride,
        padding=[(padding[0], padding[0]), (padding[1], padding[1])],
        dimension_numbers=("NCHW", "OIHW", "NCHW"),
        feature_group_count=groups)
    y = y + shift.reshape(1, -1, 1, 1)
    return _prelu(y, alpha)


def _run_case(key, N, Cin, H, W, Cout, KH, KW, stride, padding, groups):
    kx, kw_, kg, kb, km, kv, ka = jax.random.split(key, 7)
    x = jax.random.normal(kx, (N, Cin, H, W), dtype=jnp.float32)
    w = jax.random.normal(kw_, (Cout, Cin // groups, KH, KW), dtype=jnp.float32) * 0.1
    gamma = 1.0 + 0.1 * jax.random.normal(kg, (Cout,), dtype=jnp.float32)
    beta = 0.1 * jax.random.normal(kb, (Cout,), dtype=jnp.float32)
    mean = 0.1 * jax.random.normal(km, (Cout,), dtype=jnp.float32)
    var = jnp.abs(1.0 + 0.1 * jax.random.normal(kv, (Cout,), dtype=jnp.float32))
    alpha = 0.25 + 0.05 * jax.random.normal(ka, (Cout,), dtype=jnp.float32)

    out = conv_block(x, w, gamma, beta, mean, var, alpha,
                     stride=stride, padding=padding, groups=groups)
    out = jax.block_until_ready(out)

    H_out = (H + 2 * padding[0] - KH) // stride[0] + 1
    W_out = (W + 2 * padding[1] - KW) // stride[1] + 1
    assert out.shape == (N, Cout, H_out, W_out), out.shape

    ref_q = _reference_bf16(x, w, gamma, beta, mean, var, alpha,
                            stride=stride, padding=padding, groups=groups)
    ref_f = _reference_f32(x, w, gamma, beta, mean, var, alpha,
                           stride=stride, padding=padding, groups=groups)
    err_q = float(jnp.max(jnp.abs(out - ref_q)))   # tight: same bf16 quantization
    err_f = float(jnp.max(jnp.abs(out - ref_f)))   # loose: vs pure-f32 reference
    k_eff = (Cin // groups) * KH * KW
    assert err_q < 2e-3, err_q
    assert err_f < 5e-2 * max(1.0, (k_eff / 36.0) ** 0.5), err_f


if __name__ == "__main__":
    key = jax.random.PRNGKey(0)
    ks = jax.random.split(key, 6)

    # 1) 3x3 stem conv (Cin=4): dense, wrapper-im2col single-matmul path
    _run_case(ks[0], N=2, Cin=4, H=16, W=16, Cout=8, KH=3, KW=3,
              stride=(1, 1), padding=(1, 1), groups=1)
    # 2) depthwise 3x3 stride-2 (groups == Cin == Cout): VPU path + stride phases
    _run_case(ks[1], N=2, Cin=8, H=16, W=16, Cout=8, KH=3, KW=3,
              stride=(2, 2), padding=(1, 1), groups=8)
    # 3) grouped conv (groups=2): folded to dense via block-diagonal weight
    _run_case(ks[2], N=2, Cin=8, H=16, W=16, Cout=8, KH=3, KW=3,
              stride=(1, 1), padding=(1, 1), groups=2)
    # 4) taller image: im2col path with several output-row tiles (R > 1)
    _run_case(ks[3], N=1, Cin=4, H=40, W=16, Cout=8, KH=3, KW=3,
              stride=(1, 1), padding=(1, 1), groups=1)
    # 5) wider Cin (K > 256): general per-tap MXU path, R > 1 with padded tail rows
    _run_case(ks[4], N=1, Cin=32, H=40, W=8, Cout=16, KH=3, KW=3,
              stride=(1, 1), padding=(1, 1), groups=1)
    # 6) Conv_block defaults: 1x1 kernel, stride 1, no padding
    _run_case(ks[5], N=2, Cin=4, H=8, W=8, Cout=8, KH=1, KW=1,
              stride=(1, 1), padding=(0, 0), groups=1)

    print("KERNEL_OK")
</pallas_src>

<mosaic_0001>
module attributes {stable_mosaic.version = 11 : i64} {
  func.func @_matmul_bn_prelu_kernel(%arg0: i32, %arg1: i32, %arg2: memref<1x256x36xbf16, #tpu.memory_space<vmem>>, %arg3: memref<36x128xbf16, #tpu.memory_space<vmem>>, %arg4: memref<2x128xf32, #tpu.memory_space<vmem>>, %arg5: memref<1x256x128xf32, #tpu.memory_space<vmem>>) attributes {dimension_semantics = [#tpu.dimension_semantics<parallel>, #tpu.dimension_semantics<parallel>], iteration_bounds = array<i64: 2, 1>, scalar_prefetch = 0 : i64, scratch_operands = 0 : i64, tpu.core_type = #tpu.core_type<tc>, window_params = [{transform_indices = @transform_0, window_bounds = array<i64: 1, 256, 36>}, {pipeline_mode = #tpu.pipeline_mode<synchronous>, transform_indices = @transform_1, window_bounds = array<i64: 36, 128>}, {pipeline_mode = #tpu.pipeline_mode<synchronous>, transform_indices = @transform_2, window_bounds = array<i64: 2, 128>}, {transform_indices = @transform_3, window_bounds = array<i64: 1, 256, 128>}]} {
    %c0 = arith.constant 0 : index
    %c0_0 = arith.constant 0 : index
    %c0_1 = arith.constant 0 : index
    %0 = vector.load %arg2[%c0, %c0_0, %c0_1] : memref<1x256x36xbf16, #tpu.memory_space<vmem>>, vector<1x256x36xbf16>
    %1 = vector.shape_cast %0 : vector<1x256x36xbf16> to vector<256x36xbf16>
    %c0_2 = arith.constant 0 : index
    %c0_3 = arith.constant 0 : index
    %2 = vector.load %arg3[%c0_2, %c0_3] : memref<36x128xbf16, #tpu.memory_space<vmem>>, vector<36x128xbf16>
    %cst = arith.constant dense<0.000000e+00> : vector<256x128xf32>
    %3 = tpu.matmul %1, %2, %cst {dimension_numbers = #tpu.dot_dimension_numbers<[1], [0], [0], [1], [0, 0, 1, 1], [], []>} : vector<256x36xbf16>, vector<36x128xbf16>, vector<256x128xf32> -> vector<256x128xf32>
    %c0_4 = arith.constant 0 : index
    %c0_5 = arith.constant 0 : index
    %4 = vector.load %arg4[%c0_4, %c0_5] : memref<2x128xf32, #tpu.memory_space<vmem>>, vector<1x128xf32>
    %5 = vector.broadcast %4 : vector<1x128xf32> to vector<256x128xf32>
    %6 = arith.addf %3, %5 : vector<256x128xf32>
    %cst_6 = arith.constant 0.000000e+00 : f32
    %7 = vector.broadcast %cst_6 : f32 to vector<256x128xf32>
    %8 = arith.cmpf oge, %6, %7 : vector<256x128xf32>
    %c1 = arith.constant 1 : index
    %c0_7 = arith.constant 0 : index
    %9 = vector.load %arg4[%c1, %c0_7] : memref<2x128xf32, #tpu.memory_space<vmem>>, vector<1x128xf32>
    %10 = vector.broadcast %9 : vector<1x128xf32> to vector<256x128xf32>
    %11 = arith.mulf %10, %6 : vector<256x128xf32>
    %12 = arith.select %8, %6, %11 : vector<256x128xi1>, vector<256x128xf32>
    %c0_8 = arith.constant 0 : index
    %c0_9 = arith.constant 0 : index
    %c0_10 = arith.constant 0 : index
    %13 = vector.load %arg5[%c0_8, %c0_9, %c0_10] : memref<1x256x128xf32, #tpu.memory_space<vmem>>, vector<1x256x128xf32>
    %14 = vector.shape_cast %13 : vector<1x256x128xf32> to vector<256x128xf32>
    %15 = vector.shape_cast %12 : vector<256x128xf32> to vector<1x256x128xf32>
    tpu.vector_store %arg5[%c0_8, %c0_9, %c0_10], %15 {strides = array<i32>} : memref<1x256x128xf32, #tpu.memory_space<vmem>>, vector<1x256x128xf32>,
    return
  }
  func.func @transform_0(%arg0: i32, %arg1: i32) -> (i32, i32, i32) {
    %c0_i32 = arith.constant 0 : i32
    %c0_i32_0 = arith.constant 0 : i32
    return %arg0, %arg1, %c0_i32 : i32, i32, i32
  }
  func.func @transform_1(%arg0: i32, %arg1: i32) -> (i32, i32) {
    %c0_i32 = arith.constant 0 : i32
    %c0_i32_0 = arith.constant 0 : i32
    %c0_i32_1 = arith.constant 0 : i32
    return %c0_i32, %c0_i32_0 : i32, i32
  }
  func.func @transform_2(%arg0: i32, %arg1: i32) -> (i32, i32) {
    %c0_i32 = arith.constant 0 : i32
    %c0_i32_0 = arith.constant 0 : i32
    %c0_i32_1 = arith.constant 0 : i32
    return %c0_i32, %c0_i32_0 : i32, i32
  }
  func.func @transform_3(%arg0: i32, %arg1: i32) -> (i32, i32, i32) {
    %c0_i32 = arith.constant 0 : i32
    %c0_i32_0 = arith.constant 0 : i32
    return %arg0, %arg1, %c0_i32 : i32, i32, i32
  }
}

</mosaic_0001>

<llo_original>
// kernel: tpu_custom_call.1
$region0: #{tpu_custom_call.1}
  #allocation0 [shape = 'u32[]', space=smem, size = 0x4, offset = 0x4, fixed_abs, tag = 'smem constant byte address 0x4 - core index']
  #allocation1 [shape = 'u32[144,128]{1,0:T(1,128)}', space=vmem, size = 0x12000, scoped, tag = 'internal scratch']
  %s0 = inlined_call_operand.vmem [shape: bf16[2,256,36], index: 0, kind: input, shape index: {}]
  %s1 = inlined_call_operand.vmem [shape: bf16[36,128], index: 1, kind: input, shape index: {}]
  %s2 = inlined_call_operand.vmem [shape: f32[2,128], index: 2, kind: input, shape index: {}]
  %s3 = inlined_call_operand.hbm [shape: f32[2,256,128], index: 3, kind: output, shape index: {}]
  %s4 = sld [smem:[#allocation0]]
  $region45: #{tpu_custom_call.1} parent=0
    _
  %s6 = ssub.s32 1, %s4
  %s7 = scalar_select 0, %s6, %s4
  $region1: #{tpu_custom_call.1} parent=0
    #allocation2 [shape = 'u8[262144]{0}', space=vmem, size = 0x40000, scoped, tag = 'output window, operand 0']
    #allocation3 [shape = 's32[2]{0}', space=sflag, size = 0x8, scoped, tag = 'scoped memory for tpu_custom_call.1']
    %8 = vsyncpa [#allocation3], 0
    %s9 = scalar_lea.sflag [#allocation3], 1
    %10 = vsyncpa %s9, 0
    loop: start=0, step=1, limit=4
    $region2: #{tpu_custom_call.1} parent=1 // loop_pre_header
      _
    $region3: #{tpu_custom_call.1} parent=1 // loop_header
      %s12 = sphi 0, %s16
      %p13 = scmp.ge.s32.totalorder %s12, 4
      %s19 = sphi 0, %s31
      %s20 = sphi 0, %s27
      %s21 = sphi 0, %s19
      %s22 = sphi 0, %s20
      %s23 = sphi 0, %s21
      %s24 = sphi 0, %s22
      %s36 = sphi 0, %s38
      %s39 = sphi 0, %s36
      %s40 = sphi 0, %s39
      %s56 = sphi 0, %s40
      %s60 = sphi 0, %s60
      %s62 = sphi 0, %s60
      %s63 = sphi 0, %s62
      %s77 = sphi 0, %s63
      %s81 = sphi 0, %s81
      %s83 = sphi 0, %s81
      %s84 = sphi 0, %s83
      %s98 = sphi 0, %s84
      %s106 = sphi 0, %s108
      %s109 = sphi 0, %s106
      %s110 = sphi 0, %s109
      %s126 = sphi 0, %s110
    $region4: #{tpu_custom_call.1} parent=1 // loop_header_branch
      %15 = sbr.rel (%p13) target = $region8
    $region5: #{tpu_custom_call.1} parent=1 // loop_body
      %s17 = ssub.s32 %s12, 1
      %s18 = ssub.s32 %s12, 2
      %s25 = sadd.s32 1, %s20
      %p26 = scmp.ge.s32.totalorder %s25, 1
      %s27 = scalar_select %p26, 0, %s25
      %s28 = sadd.s32 1, %s19
      %s29 = scalar_select %p26, %s28, %s19
      %p30 = scmp.ge.s32.totalorder %s29, 2
      %s31 = scalar_select %p30, 0, %s29
      %s32 = ssub.s32 %s19, %s31
      %s33 = ssub.s32 %s20, %s27
      %s34 = sor.u32 %s32, %s33
      %p35 = scmp.eq.s32.totalorder %s34, 0
      %s37 = sadd.s32 %s36, 1
      %s38 = scalar_select %p35, %s36, %s37
      %p41 = pneg %p35
      %p42 = scmp.eq.s32.totalorder %s12, 1
      %p43 = por %p41, %p42
      %p44 = scmp.ne.s32.totalorder %s36, %s39
      %p45 = scmp.eq.s32.totalorder %s12, 0
      %p46 = por %p44, %p45
      %p47 = scmp.ne.s32.totalorder %s36, %s39
      %p48 = scmp.eq.s32.totalorder %s17, 1
      %p49 = por %p47, %p48
      %p50 = scmp.ne.s32.totalorder %s39, %s40
      %p51 = scmp.eq.s32.totalorder %s17, 0
      %p52 = por %p50, %p51
      %p53 = scmp.ne.s32.totalorder %s39, %s40
      %p54 = scmp.eq.s32.totalorder %s18, 1
      %p55 = por %p53, %p54
      %p57 = scmp.ne.s32.totalorder %s40, %s56
      %p58 = scmp.eq.s32.totalorder %s18, 0
      %p59 = por %p57, %p58
      %s61 = sadd.s32 %s60, 1
      %p64 = scmp.eq.s32.totalorder %s12, 1
      %p65 = scmp.ne.s32.totalorder %s60, %s62
      %p66 = scmp.eq.s32.totalorder %s12, 0
      %p67 = por %p65, %p66
      %p68 = scmp.ne.s32.totalorder %s60, %s62
      %p69 = scmp.eq.s32.totalorder %s17, 1
      %p70 = por %p68, %p69
      %p71 = scmp.ne.s32.totalorder %s62, %s63
      %p72 = scmp.eq.s32.totalorder %s17, 0
      %p73 = por %p71, %p72
      %p74 = scmp.ne.s32.totalorder %s62, %s63
      %p75 = scmp.eq.s32.totalorder %s18, 1
      %p76 = por %p74, %p75
      %p78 = scmp.ne.s32.totalorder %s63, %s77
      %p79 = scmp.eq.s32.totalorder %s18, 0
      %p80 = por %p78, %p79
      %s82 = sadd.s32 %s81, 1
      %p85 = scmp.eq.s32.totalorder %s12, 1
      %p86 = scmp.ne.s32.totalorder %s81, %s83
      %p87 = scmp.eq.s32.totalorder %s12, 0
      %p88 = por %p86, %p87
      %p89 = scmp.ne.s32.totalorder %s81, %s83
      %p90 = scmp.eq.s32.totalorder %s17, 1
      %p91 = por %p89, %p90
      %p92 = scmp.ne.s32.totalorder %s83, %s84
      %p93 = scmp.eq.s32.totalorder %s17, 0
      %p94 = por %p92, %p93
      %p95 = scmp.ne.s32.totalorder %s83, %s84
      %p96 = scmp.eq.s32.totalorder %s18, 1
      %p97 = por %p95, %p96
      %p99 = scmp.ne.s32.totalorder %s84, %s98
      %p100 = scmp.eq.s32.totalorder %s18, 0
      %p101 = por %p99, %p100
      %s102 = ssub.s32 %s19, %s31
      %s103 = ssub.s32 %s20, %s27
      %s104 = sor.u32 %s102, %s103
      %p105 = scmp.eq.s32.totalorder %s104, 0
      %s107 = sadd.s32 %s106, 1
      %s108 = scalar_select %p105, %s106, %s107
      %p111 = pneg %p105
      %p112 = scmp.eq.s32.totalorder %s12, 1
      %p113 = por %p111, %p112
      %p114 = scmp.ne.s32.totalorder %s106, %s109
      %p115 = scmp.eq.s32.totalorder %s12, 0
      %p116 = por %p114, %p115
      %p117 = scmp.ne.s32.totalorder %s106, %s109
      %p118 = scmp.eq.s32.totalorder %s17, 1
      %p119 = por %p117, %p118
      %p120 = scmp.ne.s32.totalorder %s109, %s110
      %p121 = scmp.eq.s32.totalorder %s17, 0
      %p122 = por %p120, %p121
      %p123 = scmp.ne.s32.totalorder %s109, %s110
      %p124 = scmp.eq.s32.totalorder %s18, 1
      %p125 = por %p123, %p124
      %p127 = scmp.ne.s32.totalorder %s110, %s126
      %p128 = scmp.eq.s32.totalorder %s18, 0
      %p129 = por %p127, %p128
      %p130 = scmp.le.s32.totalorder 1, %s12
      %p131 = scmp.lt.s32.totalorder %s12, 3
      %p132 = pnand %p130, %p131
      %p133 = pneg %p132
      // Predicated region
      $region9: #{tpu_custom_call.1} parent=5 // pred_check
        _
      $region10: #{tpu_custom_call.1} parent=5 // pred_check_branch
        %135 = sbr.rel (%p132) target = $region12
      $region11: #{tpu_custom_call.1} parent=5 // pred_region
        %s136 = ssub.s32 %s12, 1
        // Predicated region
        $region13: #{tpu_custom_call.1} parent=11 // pred_check
          %p137 = pneg %p73
        $region14: #{tpu_custom_call.1} parent=11 // pred_check_branch
          %139 = sbr.rel (%p137) target = $region16
        $region15: #{tpu_custom_call.1} parent=11 // pred_region
          _
        $region16: #{tpu_custom_call.1} parent=11 // pred_fallthru
          _
        // Predicated region
        $region17: #{tpu_custom_call.1} parent=11 // pred_check
          %p140 = pneg %p94
        $region18: #{tpu_custom_call.1} parent=11 // pred_check_branch
          %142 = sbr.rel (%p140) target = $region20
        $region19: #{tpu_custom_call.1} parent=11 // pred_region
          _
        $region20: #{tpu_custom_call.1} parent=11 // pred_fallthru
          _
      $region12: #{tpu_custom_call.1} parent=5 // pred_fallthru
        _
      %p143 = scmp.lt.s32.totalorder %s12, 2
      // Predicated region
      $region21: #{tpu_custom_call.1} parent=5 // pred_check
        %p144 = pneg %p143
      $region22: #{tpu_custom_call.1} parent=5 // pred_check_branch
        %146 = sbr.rel (%p144) target = $region24
      $region23: #{tpu_custom_call.1} parent=5 // pred_region
        // Predicated region
        $region25: #{tpu_custom_call.1} parent=23 // pred_check
          %p147 = pneg %p46
        $region26: #{tpu_custom_call.1} parent=23 // pred_check_branch
          %149 = sbr.rel (%p147) target = $region28
        $region27: #{tpu_custom_call.1} parent=23 // pred_region
          %s150 = smul.u32 32, %s20
          %p151 = scmp.lt.s32.totalorder %s19, 1
          %s152 = scalar_select %p151, %s19, 1
          %p153 = scmp.lt.s32.totalorder %s150, 31
          %s154 = scalar_select %p153, %s150, 31
          %s155 = smul.addr %s152, 32
          %s156 = sadd.s32 %s154, %s155
          %s157 = smul.addr %s156, 4
          %s158 = scalar_lea.vmem %s0, %s157
          %s159 = smul.u32 32, %s20
        $region28: #{tpu_custom_call.1} parent=23 // pred_fallthru
          _
      $region24: #{tpu_custom_call.1} parent=5 // pred_fallthru
        _
      %p160 = scmp.le.s32.totalorder 1, %s12
      %p161 = scmp.lt.s32.totalorder %s12, 3
      %p162 = pnand %p160, %p161
      %p163 = pneg %p162
      // Predicated region
      $region29: #{tpu_custom_call.1} parent=5 // pred_check
        _
      $region30: #{tpu_custom_call.1} parent=5 // pred_check_branch
        %165 = sbr.rel (%p162) target = $region32
      $region31: #{tpu_custom_call.1} parent=5 // pred_region
        %s166 = ssub.s32 %s12, 1
        %s167 = smul.u32 32, %s22
        %p168 = scmp.lt.s32.totalorder %s21, 1
        %s169 = scalar_select %p168, %s21, 1
        %p170 = scmp.lt.s32.totalorder %s167, 31
        %s171 = scalar_select %p170, %s167, 31
        %s172 = smul.addr %s169, 32
        %s173 = sadd.s32 %s171, %s172
        %s174 = smul.addr %s173, 4
        %s175 = scalar_lea.vmem %s0, %s174
        %p176 = pneg %p52
        %p177 = pneg %p49
        %p178 = pneg %p73
        %p179 = pneg %p70
        %p180 = pneg %p94
        %p181 = pneg %p91
        %p182 = pneg %p122
        %p183 = pneg %p119
        %s184 = sand.u32 %s109, 1
        %s185 = scalar_lea.sflag [#allocation3], %s184
        %s186 = sand.u32 %s109, 1
        %s187 = smul.addr %s186, 256
        %s188 = scalar_lea.vmem [#allocation2], %s187
        %s189 = smul.u32 32, %s22
        %p190 = scmp.lt.s32.totalorder %s21, 1
        %s191 = scalar_select %p190, %s21, 1
        %p192 = scmp.lt.s32.totalorder %s189, 31
        %s193 = scalar_select %p192, %s189, 31
        %s194 = smul.addr %s191, 32
        %s195 = sadd.s32 %s193, %s194
        %s196 = smul.addr %s195, 4
        %s197 = scalar_lea.vmem %s0, %s196
        %s198 = smul.u32 32, %s22
        %s199 = smul.u32 32, %s22
        %v201 = vld [vmem:[%s197] sm:$0xf]
        %v202 = vld [vmem:[%s197 + $0x4] sm:$0xf]
        %v203 = vld [vmem:[%s197 + $0x8] sm:$0xf]
        %v204 = vld [vmem:[%s197 + $0xc] sm:$0xf]
        %v205 = vld [vmem:[%s197 + $0x10] sm:$0xf]
        %v206 = vld [vmem:[%s197 + $0x14] sm:$0xf]
        %v207 = vld [vmem:[%s197 + $0x18] sm:$0xf]
        %v208 = vld [vmem:[%s197 + $0x1c] sm:$0xf]
        %v209 = vld [vmem:[%s197 + $0x20] sm:$0xf]
        %v210 = vld [vmem:[%s197 + $0x24] sm:$0xf]
        %v211 = vld [vmem:[%s197 + $0x28] sm:$0xf]
        %v212 = vld [vmem:[%s197 + $0x2c] sm:$0xf]
        %v213 = vld [vmem:[%s197 + $0x30] sm:$0xf]
        %v214 = vld [vmem:[%s197 + $0x34] sm:$0xf]
        %v215 = vld [vmem:[%s197 + $0x38] sm:$0xf]
        %v216 = vld [vmem:[%s197 + $0x3c] sm:$0xf]
        %v217 = vld [vmem:[%s197 + $0x40] sm:$0xf]
        %v218 = vld [vmem:[%s197 + $0x44] sm:$0xf]
        %v219 = vld [vmem:[%s197 + $0x48] sm:$0xf]
        %v220 = vld [vmem:[%s197 + $0x4c] sm:$0xf]
        %v221 = vld [vmem:[%s197 + $0x50] sm:$0xf]
        %v222 = vld [vmem:[%s197 + $0x54] sm:$0xf]
        %v223 = vld [vmem:[%s197 + $0x58] sm:$0xf]
        %v224 = vld [vmem:[%s197 + $0x5c] sm:$0xf]
        %v225 = vld [vmem:[%s197 + $0x60] sm:$0xf]
        %v226 = vld [vmem:[%s197 + $0x64] sm:$0xf]
        %v227 = vld [vmem:[%s197 + $0x68] sm:$0xf]
        %v228 = vld [vmem:[%s197 + $0x6c] sm:$0xf]
        %v229 = vld [vmem:[%s197 + $0x70] sm:$0xf]
        %v230 = vld [vmem:[%s197 + $0x74] sm:$0xf]
        %v231 = vld [vmem:[%s197 + $0x78] sm:$0xf]
        %v232 = vld [vmem:[%s197 + $0x7c] sm:$0xf]
        %v233 = vld [vmem:[%s1] sm:$0xf]
        %v234 = vld [vmem:[%s1 + $0x4] sm:$0xf]
        %v235 = vld [vmem:[%s1 + $0x8] sm:$0xf]
        %v236 = vld [vmem:[%s1 + $0xc] sm:$0xf]
        %v237 = vld [vmem:[%s1 + $0x10] sm:$0x3]
        %v238 = vld [vmem:[%s2] sm:$0x1]
        %v239 = vlaneseq
        %v240 = vshrl.u32 %v239, 7
        %v241 = vsub.s32 0, %v240
        %v242 = vrot.slane %v238, %v241
        %v275 = vunpack.c.l.b16 %v201
        %v276 = vunpack.c.l.b16 %v202
        %v277 = vunpack.c.l.b16 %v203
        %v278 = vunpack.c.l.b16 %v204
        %v279 = vunpack.c.l.b16 %v205
        %v280 = vunpack.c.l.b16 %v206
        %v281 = vunpack.c.l.b16 %v207
        %v282 = vunpack.c.l.b16 %v208
        %v283 = vunpack.c.l.b16 %v209
        %v284 = vunpack.c.l.b16 %v210
        %v285 = vunpack.c.l.b16 %v211
        %v286 = vunpack.c.l.b16 %v212
        %v287 = vunpack.c.l.b16 %v213
        %v288 = vunpack.c.l.b16 %v214
        %v289 = vunpack.c.l.b16 %v215
        %v290 = vunpack.c.l.b16 %v216
        %v291 = vunpack.c.l.b16 %v217
        %v292 = vunpack.c.l.b16 %v218
        %v293 = vunpack.c.l.b16 %v219
        %v294 = vunpack.c.l.b16 %v220
        %v295 = vunpack.c.l.b16 %v221
        %v296 = vunpack.c.l.b16 %v222
        %v297 = vunpack.c.l.b16 %v223
        %v298 = vunpack.c.l.b16 %v224
        %v299 = vunpack.c.l.b16 %v225
        %v300 = vunpack.c.l.b16 %v226
        %v301 = vunpack.c.l.b16 %v227
        %v302 = vunpack.c.l.b16 %v228
        %v303 = vunpack.c.l.b16 %v229
        %v304 = vunpack.c.l.b16 %v230
        %v305 = vunpack.c.l.b16 %v231
        %v306 = vunpack.c.l.b16 %v232
        %v307 = vpack.c.b16 %v276, %v275
        %v308 = vpack.c.b16 %v278, %v277
        %v309 = vpack.c.b16 %v280, %v279
        %v310 = vpack.c.b16 %v282, %v281
        %v311 = vpack.c.b16 %v284, %v283
        %v312 = vpack.c.b16 %v286, %v285
        %v313 = vpack.c.b16 %v288, %v287
        %v314 = vpack.c.b16 %v290, %v289
        %v315 = vpack.c.b16 %v292, %v291
        %v316 = vpack.c.b16 %v294, %v293
        %v317 = vpack.c.b16 %v296, %v295
        %v318 = vpack.c.b16 %v298, %v297
        %v319 = vpack.c.b16 %v300, %v299
        %v320 = vpack.c.b16 %v302, %v301
        %v321 = vpack.c.b16 %v304, %v303
        %v322 = vpack.c.b16 %v306, %v305
        %v328 = vunpack.c.l.b16 %v233
        %v329 = vunpack.c.l.b16 %v234
        %v330 = vunpack.c.l.b16 %v235
        %v331 = vunpack.c.l.b16 %v236
        %v332 = vunpack.c.l.b16 %v237
        %v333 = vpack.c.b16 %v329, %v328
        %v334 = vpack.c.b16 %v331, %v330
        %v335 = vpack.c.b16 %v332, %v332
        %vm338 = vcmask 293888
        %v340 = vsel %vm338, %v307, 0
        %v343 = vsel %vm338, %v308, 0
        %v346 = vsel %vm338, %v309, 0
        %v349 = vsel %vm338, %v310, 0
        %v352 = vsel %vm338, %v311, 0
        %v355 = vsel %vm338, %v312, 0
        %v358 = vsel %vm338, %v313, 0
        %v361 = vsel %vm338, %v314, 0
        %v364 = vsel %vm338, %v315, 0
        %v367 = vsel %vm338, %v316, 0
        %v370 = vsel %vm338, %v317, 0
        %v373 = vsel %vm338, %v318, 0
        %v376 = vsel %vm338, %v319, 0
        %v379 = vsel %vm338, %v320, 0
        %v382 = vsel %vm338, %v321, 0
        %v385 = vsel %vm338, %v322, 0
        %vm387 = vcmask 1041408
        %v389 = vsel %vm387, %v335, 0
        %391 = vmatprep.subr.bf16.mxu0 0
        %392 = vmatpush1.bf16.msra.mxu0 %v333
        %393 = vmatprep.subr.bf16.mxu0 0
        %394 = vmatpush1.bf16.msra.mxu0 %v334
        %395 = vmatprep.subr.bf16.mxu0 0
        %396 = vmatpush1.bf16.msra.mxu0 %v389
        %397 = vmatprep.subr.bf16.mxu0 0
        %398 = vmatpush1.bf16.msra.mxu0 0
        %399 = vmatprep.subr.bf16.mxu0 0
        %400 = vmatpush1.bf16.msra.mxu0 0
        %401 = vmatprep.subr.bf16.mxu0 0
        %402 = vmatpush1.bf16.msra.mxu0 0
        %403 = vmatprep.subr.bf16.mxu0 0
        %404 = vmatpush1.bf16.msra.mxu0 0
        %405 = vmatprep.subr.bf16.mxu0 0
        %406 = vmatpush1.bf16.msra.mxu0 0
        %407 = vmatprep.subr.bf16.mxu0 0
        %408 = vmatpush1.bf16.msra.mxu0 0
        %409 = vmatprep.subr.bf16.mxu0 0
        %410 = vmatpush1.bf16.msra.mxu0 0
        %411 = vmatprep.subr.bf16.mxu0 0
        %412 = vmatpush1.bf16.msra.mxu0 0
        %413 = vmatprep.subr.bf16.mxu0 0
        %414 = vmatpush1.bf16.msra.mxu0 0
        %415 = vmatprep.subr.bf16.mxu0 0
        %416 = vmatpush1.bf16.msra.mxu0 0
        %417 = vmatprep.subr.bf16.mxu0 0
        %418 = vmatpush1.bf16.msra.mxu0 0
        %419 = vmatprep.subr.bf16.mxu0 0
        %420 = vmatpush1.bf16.msra.mxu0 0
        %421 = vmatprep.subr.bf16.mxu0 0
        %422 = vmatpush1.bf16.msra.mxu0 0
        %423 = vmatprep.mubr.bf16.mxu0 0
        %424 = vmatmul.mubr.bf16.gmra.mrb[0].mxu0 %v340
        %v425 = vpop.f32.mrb[0].mxu0
        %v426 = vadd.f32 %v242, %v425
        %v427 = vpop.f32.mrb[0].mxu0
        %v428 = vpop.f32.mrb[0].mxu0
        %v429 = vadd.f32 %v242, %v428
        %v430 = vpop.f32.mrb[0].mxu0
        %431 = vmatprep.mubr.bf16.mxu0 0
        %432 = vmatmul.mubr.bf16.gmra.mrb[0].mxu0 %v343
        %v433 = vpop.f32.mrb[0].mxu0
        %v434 = vadd.f32 %v242, %v433
        %v435 = vpop.f32.mrb[0].mxu0
        %v436 = vpop.f32.mrb[0].mxu0
        %v437 = vadd.f32 %v242, %v436
        %v438 = vpop.f32.mrb[0].mxu0
        %439 = vmatprep.mubr.bf16.mxu0 0
        %440 = vmatmul.mubr.bf16.gmra.mrb[0].mxu0 %v346
        %v441 = vpop.f32.mrb[0].mxu0
        %v442 = vadd.f32 %v242, %v441
        %v443 = vpop.f32.mrb[0].mxu0
        %v444 = vpop.f32.mrb[0].mxu0
        %v445 = vadd.f32 %v242, %v444
        %v446 = vpop.f32.mrb[0].mxu0
        %447 = vmatprep.mubr.bf16.mxu0 0
        %448 = vmatmul.mubr.bf16.gmra.mrb[0].mxu0 %v349
        %v449 = vpop.f32.mrb[0].mxu0
        %v450 = vadd.f32 %v242, %v449
        %v451 = vpop.f32.mrb[0].mxu0
        %v452 = vpop.f32.mrb[0].mxu0
        %v453 = vadd.f32 %v242, %v452
        %v454 = vpop.f32.mrb[0].mxu0
        %455 = vmatprep.mubr.bf16.mxu0 0
        %456 = vmatmul.mubr.bf16.gmra.mrb[0].mxu0 %v352
        %v457 = vpop.f32.mrb[0].mxu0
        %v458 = vadd.f32 %v242, %v457
        %v459 = vpop.f32.mrb[0].mxu0
        %v460 = vpop.f32.mrb[0].mxu0
        %v461 = vadd.f32 %v242, %v460
        %v462 = vpop.f32.mrb[0].mxu0
        %463 = vmatprep.mubr.bf16.mxu0 0
        %464 = vmatmul.mubr.bf16.gmra.mrb[0].mxu0 %v355
        %v465 = vpop.f32.mrb[0].mxu0
        %v466 = vadd.f32 %v242, %v465
        %v467 = vpop.f32.mrb[0].mxu0
        %v468 = vpop.f32.mrb[0].mxu0
        %v469 = vadd.f32 %v242, %v468
        %v470 = vpop.f32.mrb[0].mxu0
        %471 = vmatprep.mubr.bf16.mxu0 0
        %472 = vmatmul.mubr.bf16.gmra.mrb[0].mxu0 %v358
        %v473 = vpop.f32.mrb[0].mxu0
        %v474 = vadd.f32 %v242, %v473
        %v475 = vpop.f32.mrb[0].mxu0
        %v476 = vpop.f32.mrb[0].mxu0
        %v477 = vadd.f32 %v242, %v476
        %v478 = vpop.f32.mrb[0].mxu0
        %479 = vmatprep.mubr.bf16.mxu0 0
        %480 = vmatmul.mubr.bf16.gmra.mrb[0].mxu0 %v361
        %v481 = vpop.f32.mrb[0].mxu0
        %v482 = vadd.f32 %v242, %v481
        %v483 = vpop.f32.mrb[0].mxu0
        %v484 = vpop.f32.mrb[0].mxu0
        %v485 = vadd.f32 %v242, %v484
        %v486 = vpop.f32.mrb[0].mxu0
        %487 = vmatprep.mubr.bf16.mxu0 0
        %488 = vmatmul.mubr.bf16.gmra.mrb[0].mxu0 %v364
        %v489 = vpop.f32.mrb[0].mxu0
        %v490 = vadd.f32 %v242, %v489
        %v491 = vpop.f32.mrb[0].mxu0
        %v492 = vpop.f32.mrb[0].mxu0
        %v493 = vadd.f32 %v242, %v492
        %v494 = vpop.f32.mrb[0].mxu0
        %495 = vmatprep.mubr.bf16.mxu0 0
        %496 = vmatmul.mubr.bf16.gmra.mrb[0].mxu0 %v367
        %v497 = vpop.f32.mrb[0].mxu0
        %v498 = vadd.f32 %v242, %v497
        %v499 = vpop.f32.mrb[0].mxu0
        %v500 = vpop.f32.mrb[0].mxu0
        %v501 = vadd.f32 %v242, %v500
        %v502 = vpop.f32.mrb[0].mxu0
        %503 = vmatprep.mubr.bf16.mxu0 0
        %504 = vmatmul.mubr.bf16.gmra.mrb[0].mxu0 %v370
        %v505 = vpop.f32.mrb[0].mxu0
        %v506 = vadd.f32 %v242, %v505
        %v507 = vpop.f32.mrb[0].mxu0
        %v508 = vpop.f32.mrb[0].mxu0
        %v509 = vadd.f32 %v242, %v508
        %v510 = vpop.f32.mrb[0].mxu0
        %511 = vmatprep.mubr.bf16.mxu0 0
        %512 = vmatmul.mubr.bf16.gmra.mrb[0].mxu0 %v373
        %v513 = vpop.f32.mrb[0].mxu0
        %v514 = vadd.f32 %v242, %v513
        %v515 = vpop.f32.mrb[0].mxu0
        %v516 = vpop.f32.mrb[0].mxu0
        %v517 = vadd.f32 %v242, %v516
        %v518 = vpop.f32.mrb[0].mxu0
        %519 = vmatprep.mubr.bf16.mxu0 0
        %520 = vmatmul.mubr.bf16.gmra.mrb[0].mxu0 %v376
        %v521 = vpop.f32.mrb[0].mxu0
        %v522 = vadd.f32 %v242, %v521
        %v523 = vpop.f32.mrb[0].mxu0
        %v524 = vpop.f32.mrb[0].mxu0
        %v525 = vadd.f32 %v242, %v524
        %v526 = vpop.f32.mrb[0].mxu0
        %527 = vmatprep.mubr.bf16.mxu0 0
        %528 = vmatmul.mubr.bf16.gmra.mrb[0].mxu0 %v379
        %v529 = vpop.f32.mrb[0].mxu0
        %v530 = vadd.f32 %v242, %v529
        %v531 = vpop.f32.mrb[0].mxu0
        %v532 = vpop.f32.mrb[0].mxu0
        %v533 = vadd.f32 %v242, %v532
        %v534 = vpop.f32.mrb[0].mxu0
        %535 = vmatprep.mubr.bf16.mxu0 0
        %536 = vmatmul.mubr.bf16.gmra.mrb[0].mxu0 %v382
        %v537 = vpop.f32.mrb[0].mxu0
        %v538 = vadd.f32 %v242, %v537
        %v539 = vpop.f32.mrb[0].mxu0
        %v540 = vpop.f32.mrb[0].mxu0
        %v541 = vadd.f32 %v242, %v540
        %v542 = vpop.f32.mrb[0].mxu0
        %543 = vmatprep.mubr.bf16.mxu0 0
        %544 = vmatmul.mubr.bf16.gmra.mrb[0].mxu0 %v385
        %v545 = vpop.f32.mrb[0].mxu0
        %v546 = vadd.f32 %v242, %v545
        %v547 = vpop.f32.mrb[0].mxu0
        %v548 = vpop.f32.mrb[0].mxu0
        %v549 = vadd.f32 %v242, %v548
        %v550 = vpop.f32.mrb[0].mxu0
        %551 = vdwg.mxu0
        %vm552 = vcmp.ge.f32.partialorder %v426, 0.0
        %vm553 = vcmp.ge.f32.partialorder %v429, 0.0
        %vm554 = vcmp.ge.f32.partialorder %v434, 0.0
        %vm555 = vcmp.ge.f32.partialorder %v437, 0.0
        %vm556 = vcmp.ge.f32.partialorder %v442, 0.0
        %vm557 = vcmp.ge.f32.partialorder %v445, 0.0
        %vm558 = vcmp.ge.f32.partialorder %v450, 0.0
        %vm559 = vcmp.ge.f32.partialorder %v453, 0.0
        %vm560 = vcmp.ge.f32.partialorder %v458, 0.0
        %vm561 = vcmp.ge.f32.partialorder %v461, 0.0
        %vm562 = vcmp.ge.f32.partialorder %v466, 0.0
        %vm563 = vcmp.ge.f32.partialorder %v469, 0.0
        %vm564 = vcmp.ge.f32.partialorder %v474, 0.0
        %vm565 = vcmp.ge.f32.partialorder %v477, 0.0
        %vm566 = vcmp.ge.f32.partialorder %v482, 0.0
        %vm567 = vcmp.ge.f32.partialorder %v485, 0.0
        %vm568 = vcmp.ge.f32.partialorder %v490, 0.0
        %vm569 = vcmp.ge.f32.partialorder %v493, 0.0
        %vm570 = vcmp.ge.f32.partialorder %v498, 0.0
        %vm571 = vcmp.ge.f32.partialorder %v501, 0.0
        %vm572 = vcmp.ge.f32.partialorder %v506, 0.0
        %vm573 = vcmp.ge.f32.partialorder %v509, 0.0
        %vm574 = vcmp.ge.f32.partialorder %v514, 0.0
        %vm575 = vcmp.ge.f32.partialorder %v517, 0.0
        %vm576 = vcmp.ge.f32.partialorder %v522, 0.0
        %vm577 = vcmp.ge.f32.partialorder %v525, 0.0
        %vm578 = vcmp.ge.f32.partialorder %v530, 0.0
        %vm579 = vcmp.ge.f32.partialorder %v533, 0.0
        %vm580 = vcmp.ge.f32.partialorder %v538, 0.0
        %vm581 = vcmp.ge.f32.partialorder %v541, 0.0
        %vm582 = vcmp.ge.f32.partialorder %v546, 0.0
        %vm583 = vcmp.ge.f32.partialorder %v549, 0.0
        %v584 = vld [vmem:[%s2 + $0x1] sm:$0x1]
        %v585 = vlaneseq
        %v586 = vshrl.u32 %v585, 7
        %v587 = vsub.s32 0, %v586
        %v588 = vrot.slane %v584, %v587
        %v589 = vmul.f32 %v588, %v426
        %v590 = vmul.f32 %v588, %v429
        %v591 = vmul.f32 %v588, %v434
        %v592 = vmul.f32 %v588, %v437
        %v593 = vmul.f32 %v588, %v442
        %v594 = vmul.f32 %v588, %v445
        %v595 = vmul.f32 %v588, %v450
        %v596 = vmul.f32 %v588, %v453
        %v597 = vmul.f32 %v588, %v458
        %v598 = vmul.f32 %v588, %v461
        %v599 = vmul.f32 %v588, %v466
        %v600 = vmul.f32 %v588, %v469
        %v601 = vmul.f32 %v588, %v474
        %v602 = vmul.f32 %v588, %v477
        %v603 = vmul.f32 %v588, %v482
        %v604 = vmul.f32 %v588, %v485
        %v605 = vmul.f32 %v588, %v490
        %v606 = vmul.f32 %v588, %v493
        %v607 = vmul.f32 %v588, %v498
        %v608 = vmul.f32 %v588, %v501
        %v609 = vmul.f32 %v588, %v506
        %v610 = vmul.f32 %v588, %v509
        %v611 = vmul.f32 %v588, %v514
        %v612 = vmul.f32 %v588, %v517
        %v613 = vmul.f32 %v588, %v522
        %v614 = vmul.f32 %v588, %v525
        %v615 = vmul.f32 %v588, %v530
        %v616 = vmul.f32 %v588, %v533
        %v617 = vmul.f32 %v588, %v538
        %v618 = vmul.f32 %v588, %v541
        %v619 = vmul.f32 %v588, %v546
        %v620 = vmul.f32 %v588, %v549
        %v621 = vsel %vm552, %v426, %v589
        %v622 = vsel %vm553, %v429, %v590
        %v623 = vsel %vm554, %v434, %v591
        %v624 = vsel %vm555, %v437, %v592
        %v625 = vsel %vm556, %v442, %v593
        %v626 = vsel %vm557, %v445, %v594
        %v627 = vsel %vm558, %v450, %v595
        %v628 = vsel %vm559, %v453, %v596
        %v629 = vsel %vm560, %v458, %v597
        %v630 = vsel %vm561, %v461, %v598
        %v631 = vsel %vm562, %v466, %v599
        %v632 = vsel %vm563, %v469, %v600
        %v633 = vsel %vm564, %v474, %v601
        %v634 = vsel %vm565, %v477, %v602
        %v635 = vsel %vm566, %v482, %v603
        %v636 = vsel %vm567, %v485, %v604
        %v637 = vsel %vm568, %v490, %v605
        %v638 = vsel %vm569, %v493, %v606
        %v639 = vsel %vm570, %v498, %v607
        %v640 = vsel %vm571, %v501, %v608
        %v641 = vsel %vm572, %v506, %v609
        %v642 = vsel %vm573, %v509, %v610
        %v643 = vsel %vm574, %v514, %v611
        %v644 = vsel %vm575, %v517, %v612
        %v645 = vsel %vm576, %v522, %v613
        %v646 = vsel %vm577, %v525, %v614
        %v647 = vsel %vm578, %v530, %v615
        %v648 = vsel %vm579, %v533, %v616
        %v649 = vsel %vm580, %v538, %v617
        %v650 = vsel %vm581, %v541, %v618
        %v651 = vsel %vm582, %v546, %v619
        %v652 = vsel %vm583, %v549, %v620
        %653 = vst [vmem:[%s188] sm:$0xff] %v621
        %654 = vst [vmem:[%s188 + $0x8] sm:$0xff] %v622
        %655 = vst [vmem:[%s188 + $0x10] sm:$0xff] %v623
        %656 = vst [vmem:[%s188 + $0x18] sm:$0xff] %v624
        %657 = vst [vmem:[%s188 + $0x20] sm:$0xff] %v625
        %658 = vst [vmem:[%s188 + $0x28] sm:$0xff] %v626
        %659 = vst [vmem:[%s188 + $0x30] sm:$0xff] %v627
        %660 = vst [vmem:[%s188 + $0x38] sm:$0xff] %v628
        %661 = vst [vmem:[%s188 + $0x40] sm:$0xff] %v629
        %662 = vst [vmem:[%s188 + $0x48] sm:$0xff] %v630
        %663 = vst [vmem:[%s188 + $0x50] sm:$0xff] %v631
        %664 = vst [vmem:[%s188 + $0x58] sm:$0xff] %v632
        %665 = vst [vmem:[%s188 + $0x60] sm:$0xff] %v633
        %666 = vst [vmem:[%s188 + $0x68] sm:$0xff] %v634
        %667 = vst [vmem:[%s188 + $0x70] sm:$0xff] %v635
        %668 = vst [vmem:[%s188 + $0x78] sm:$0xff] %v636
        %669 = vst [vmem:[%s188 + $0x80] sm:$0xff] %v637
        %670 = vst [vmem:[%s188 + $0x88] sm:$0xff] %v638
        %671 = vst [vmem:[%s188 + $0x90] sm:$0xff] %v639
        %672 = vst [vmem:[%s188 + $0x98] sm:$0xff] %v640
        %673 = vst [vmem:[%s188 + $0xa0] sm:$0xff] %v641
        %674 = vst [vmem:[%s188 + $0xa8] sm:$0xff] %v642
        %675 = vst [vmem:[%s188 + $0xb0] sm:$0xff] %v643
        %676 = vst [vmem:[%s188 + $0xb8] sm:$0xff] %v644
        %677 = vst [vmem:[%s188 + $0xc0] sm:$0xff] %v645
        %678 = vst [vmem:[%s188 + $0xc8] sm:$0xff] %v646
        %679 = vst [vmem:[%s188 + $0xd0] sm:$0xff] %v647
        %680 = vst [vmem:[%s188 + $0xd8] sm:$0xff] %v648
        %681 = vst [vmem:[%s188 + $0xe0] sm:$0xff] %v649
        %682 = vst [vmem:[%s188 + $0xe8] sm:$0xff] %v650
        %683 = vst [vmem:[%s188 + $0xf0] sm:$0xff] %v651
        %684 = vst [vmem:[%s188 + $0xf8] sm:$0xff] %v652
        %s685 = sand.u32 %s109, 1
        %s686 = scalar_lea.sflag [#allocation3], %s685
        %s687 = sand.u32 %s109, 1
        %s688 = smul.addr %s687, 256
        %s689 = scalar_lea.vmem [#allocation2], %s688
        // Predicated region
        $region33: #{tpu_custom_call.1} parent=31 // pred_check
          %p690 = pneg %p119
        $region34: #{tpu_custom_call.1} parent=31 // pred_check_branch
          %692 = sbr.rel (%p690) target = $region36
        $region35: #{tpu_custom_call.1} parent=31 // pred_region
          %s693 = smul.u32 32, %s22
          %s695 = ssub.s32 4096, 4096
          %696 = vsyncadd %s686, %s695
          %s697 = smul.addr %s21, 32
          %s698 = sadd.s32 %s693, %s697
          %s699 = smul.addr %s698, 128
          %s700 = scalar_lea.hbm %s3, %s699
          %s701 = sshll.u32 %s689, 4
          %s702 = int_to_ptr.vmem [resolvable:$true] %s701
          %707 = dma.vmem_to_hbm [thread:$0]  %s702, 4096, %s700, %s686, 128, 128, 8
        $region36: #{tpu_custom_call.1} parent=31 // pred_fallthru
          _
      $region32: #{tpu_custom_call.1} parent=5 // pred_fallthru
        _
      %p708 = scmp.le.s32.totalorder 2, %s12
      // Predicated region
      $region37: #{tpu_custom_call.1} parent=5 // pred_check
        %p709 = pneg %p708
      $region38: #{tpu_custom_call.1} parent=5 // pred_check_branch
        %711 = sbr.rel (%p709) target = $region40
      $region39: #{tpu_custom_call.1} parent=5 // pred_region
        %s712 = ssub.s32 %s12, 2
        // Predicated region
        $region41: #{tpu_custom_call.1} parent=39 // pred_check
          %p713 = pneg %p125
        $region42: #{tpu_custom_call.1} parent=39 // pred_check_branch
          %715 = sbr.rel (%p713) target = $region44
        $region43: #{tpu_custom_call.1} parent=39 // pred_region
          %s716 = sand.u32 %s110, 1
          %s717 = scalar_lea.sflag [#allocation3], %s716
          %s718 = sand.u32 %s110, 1
          %s719 = smul.addr %s718, 256
          %s720 = scalar_lea.vmem [#allocation2], %s719
          %721 = dma.done %s717, 4096
        $region44: #{tpu_custom_call.1} parent=39 // pred_fallthru
          _
      $region40: #{tpu_custom_call.1} parent=5 // pred_fallthru
        _
    $region6: #{tpu_custom_call.1} parent=1 // loop_footer
      %s16 = sadd.s32 1, %s12
    $region7: #{tpu_custom_call.1} parent=1 // loop_footer_branch
      %11 = sbr.rel target = $region3
    $region8: #{tpu_custom_call.1} parent=1 // loop_exit
      _
    %722 = vsyncpa [#allocation3], 1
    %s723 = scalar_lea.sflag [#allocation3], 1
    %724 = vsyncpa %s723, 1

</llo_original>
